<compile_context>
chip_gen: v7x
topology: tpu7x:2x2x1
jax: 0.10.0
libtpu: 0.0.40
codegen_flags: <defaults>
</compile_context>

<pallas_src>
import functools
import math

import jax
import jax.numpy as jnp
import numpy as np
from jax.experimental import pallas as pl
from jax.experimental.pallas import tpu as pltpu

_LANES = 128
_TARGET_TILE_BYTES = 2 * 1024 * 1024  # per-buffer tile budget; safe on v5e/v6e/v7x


# ----------------------------------------------------------------------------
# Parameter construction (deterministic, mirrors PyTorch __init__)
# ----------------------------------------------------------------------------
def make_pe_table(d_model: int, max_len: int = 200) -> jnp.ndarray:
    """(max_len, d_model) sinusoidal table, same math as the module."""
    position = np.arange(0, max_len, dtype=np.float32)[:, None]          # (L, 1)
    div_term = np.exp(np.arange(0, d_model, 2, dtype=np.float32)
                      * -(math.log(10000.0) / d_model))                  # (D/2,)
    pe = np.zeros((max_len, d_model), dtype=np.float32)
    pe[:, 0::2] = np.sin(position * div_term)
    pe[:, 1::2] = np.cos(position * div_term)
    return jnp.asarray(pe)


# ----------------------------------------------------------------------------
# Kernels
# ----------------------------------------------------------------------------
def _pe_add_kernel(x_ref, pe_ref, o_ref):
    # x_ref: (rows_tile, lanes), pe_ref: (1, lanes) -> broadcast add over rows.
    o_ref[...] = x_ref[...] + pe_ref[...]


def _pe_add_dropout_kernel(x_ref, bits_ref, pe_ref, o_ref, *, threshold, scale):
    # Inverted dropout: keep iff bits >= threshold  (P(keep) = 1 - p).
    # Exact integer compare; no u32->f32 conversion.
    keep = bits_ref[...] >= jnp.uint32(threshold)
    y = x_ref[...] + pe_ref[...]
    o_ref[...] = jnp.where(keep, y * scale, 0.0).astype(o_ref.dtype)


# ----------------------------------------------------------------------------
# Wrapper
# ----------------------------------------------------------------------------
def _pick_row_tile(rows: int, lanes: int, itemsize: int) -> int:
    """Largest multiple-of-8 row tile within the per-buffer VMEM budget."""
    max_rows = max(8, (_TARGET_TILE_BYTES // (lanes * itemsize)) // 8 * 8)
    return rows if rows <= max_rows else max_rows


def positional_encoding(x, pe_table, *, dropout_p=0.1, training=False,
                        rng_key=None):
    """x: (B, S, D). Returns x + pe_table[S] (broadcast), with optional
    inverted dropout when training=True."""
    B, S, D = x.shape
    max_len = pe_table.shape[0]
    if S >= max_len:
        raise ValueError(f"seq_len={S} out of range for pe table "
                         f"(max_len={max_len})")
    # pe[:, x.size(1)] -> single row at static index S, shape (D,)
    pe_row = pe_table[S].astype(x.dtype)

    # ---- lane-dense 2-D layout ------------------------------------------
    total = B * S * D
    if D % _LANES == 0:
        lanes = D
        x2 = x.reshape(B * S, D)
        pe_lane = pe_row.reshape(1, D)
    elif _LANES % D == 0 and total % _LANES == 0:
        lanes = _LANES
        x2 = x.reshape(total // _LANES, _LANES)
        pe_lane = jnp.tile(pe_row, _LANES // D).reshape(1, _LANES)
    else:
        lanes = D                                  # fallback: masked stores
        x2 = x.reshape(B * S, D)
        pe_lane = pe_row.reshape(1, D)

    rows = x2.shape[0]
    row_tile = _pick_row_tile(rows, lanes, x2.dtype.itemsize)
    grid = (pl.cdiv(rows, row_tile),)

    x_spec = pl.BlockSpec((row_tile, lanes), lambda i: (i, 0))
    pe_spec = pl.BlockSpec((1, lanes), lambda i: (0, 0))
    out_shape = jax.ShapeDtypeStruct(x2.shape, x.dtype)
    cparams = pltpu.CompilerParams(dimension_semantics=("parallel",))

    if (not training) or dropout_p == 0.0:
        y2 = pl.pallas_call(
            _pe_add_kernel,
            out_shape=out_shape,
            grid=grid,
            in_specs=[x_spec, pe_spec],
            out_specs=x_spec,
            input_output_aliases={0: 0},
            compiler_params=cparams,
        )(x2, pe_lane)
        return y2.reshape(B, S, D)

    # --- training path: fused add + inverted dropout ----------------------
    # TODO(synk): PyTorch's exact dropout RNG stream cannot be reproduced;
    # semantics (inverted dropout, keep prob 1-p) match.
    if rng_key is None:
        rng_key = jax.random.PRNGKey(0)
    bits = jax.random.bits(rng_key, x2.shape, dtype=jnp.uint32)
    threshold = min(int(round(dropout_p * 2.0 ** 32)), 2 ** 32 - 1)
    scale = 1.0 / (1.0 - dropout_p)
    kernel = functools.partial(_pe_add_dropout_kernel,
                               threshold=threshold, scale=scale)
    y2 = pl.pallas_call(
        kernel,
        out_shape=out_shape,
        grid=grid,
        in_specs=[x_spec, x_spec, pe_spec],   # bits shares x's block layout
        out_specs=x_spec,
        input_output_aliases={0: 0},
        compiler_params=cparams,
    )(x2, bits, pe_lane)
    return y2.reshape(B, S, D)


# ----------------------------------------------------------------------------
# Main
# ----------------------------------------------------------------------------
if __name__ == "__main__":
    d_model = 32
    max_len = 200
    B, S = 2, 8

    key = jax.random.PRNGKey(0)
    kx, kd = jax.random.split(key)
    x = jax.random.normal(kx, (B, S, d_model), dtype=jnp.float32)
    pe_table = make_pe_table(d_model, max_len)

    # Eval mode (dropout identity) — compare against pure-JAX reference.
    out = positional_encoding(x, pe_table, dropout_p=0.1, training=False)
    out = jax.block_until_ready(out)
    ref = x + pe_table[S][None, None, :]
    np.testing.assert_allclose(np.asarray(out), np.asarray(ref),
                               rtol=1e-6, atol=1e-6)

    # Training mode — every element must be either 0 or ref/(1-p).
    out_tr = positional_encoding(x, pe_table, dropout_p=0.1, training=True,
                                 rng_key=kd)
    out_tr = jax.block_until_ready(out_tr)
    scaled = np.asarray(ref) / (1.0 - 0.1)
    ok = np.isclose(np.asarray(out_tr), 0.0, atol=1e-6) | \
         np.isclose(np.asarray(out_tr), scaled, rtol=1e-5, atol=1e-6)
    assert ok.all()

    print("KERNEL_OK")
</pallas_src>

<mosaic_0001>
module attributes {stable_mosaic.version = 11 : i64} {
  func.func @_pe_add_kernel(%arg0: i32, %arg1: memref<4x128xf32, #tpu.memory_space<vmem>>, %arg2: memref<1x128xf32, #tpu.memory_space<vmem>>, %arg3: memref<4x128xf32, #tpu.memory_space<vmem>>) attributes {dimension_semantics = [#tpu.dimension_semantics<parallel>], iteration_bounds = array<i64: 1>, scalar_prefetch = 0 : i64, scratch_operands = 0 : i64, tpu.core_type = #tpu.core_type<tc>, window_params = [{transform_indices = @transform_0, window_bounds = array<i64: 4, 128>}, {pipeline_mode = #tpu.pipeline_mode<synchronous>, transform_indices = @transform_1, window_bounds = array<i64: 1, 128>}, {transform_indices = @transform_2, window_bounds = array<i64: 4, 128>}]} {
    %c0 = arith.constant 0 : index
    %c0_0 = arith.constant 0 : index
    %0 = vector.load %arg1[%c0, %c0_0] : memref<4x128xf32, #tpu.memory_space<vmem>>, vector<4x128xf32>
    %c0_1 = arith.constant 0 : index
    %c0_2 = arith.constant 0 : index
    %1 = vector.load %arg2[%c0_1, %c0_2] : memref<1x128xf32, #tpu.memory_space<vmem>>, vector<1x128xf32>
    %2 = vector.broadcast %1 : vector<1x128xf32> to vector<4x128xf32>
    %3 = arith.addf %0, %2 : vector<4x128xf32>
    %c0_3 = arith.constant 0 : index
    %c0_4 = arith.constant 0 : index
    %4 = vector.load %arg3[%c0_3, %c0_4] : memref<4x128xf32, #tpu.memory_space<vmem>>, vector<4x128xf32>
    tpu.vector_store %arg3[%c0_3, %c0_4], %3 {strides = array<i32>} : memref<4x128xf32, #tpu.memory_space<vmem>>, vector<4x128xf32>,
    return
  }
  func.func @transform_0(%arg0: i32) -> (i32, i32) {
    %c0_i32 = arith.constant 0 : i32
    %c0_i32_0 = arith.constant 0 : i32
    return %arg0, %c0_i32 : i32, i32
  }
  func.func @transform_1(%arg0: i32) -> (i32, i32) {
    %c0_i32 = arith.constant 0 : i32
    %c0_i32_0 = arith.constant 0 : i32
    %c0_i32_1 = arith.constant 0 : i32
    return %c0_i32, %c0_i32_0 : i32, i32
  }
  func.func @transform_2(%arg0: i32) -> (i32, i32) {
    %c0_i32 = arith.constant 0 : i32
    %c0_i32_0 = arith.constant 0 : i32
    return %arg0, %c0_i32 : i32, i32
  }
}

</mosaic_0001>

<llo_original>
// kernel: tpu_custom_call.1
$region0: #{tpu_custom_call.1}
  #allocation0 [shape = 'u32[]', space=smem, size = 0x4, offset = 0x4, fixed_abs, tag = 'smem constant byte address 0x4 - core index']
  #allocation1 [shape = 'u32[144,128]{1,0:T(1,128)}', space=vmem, size = 0x12000, scoped, tag = 'internal scratch']
  %s0 = inlined_call_operand.hbm [shape: f32[4,128], index: 0, kind: input, shape index: {}, may-alias: {0,2}]
  %s1 = inlined_call_operand.vmem [shape: f32[1,128], index: 1, kind: input, shape index: {}]
  %s2 = inlined_call_operand.hbm [shape: f32[4,128], index: 2, kind: output, shape index: {}, may-alias: {0,2}]
  %s3 = sld [smem:[#allocation0]]
  $region22: #{tpu_custom_call.1} parent=0
    _
  %s5 = ssub.s32 1, %s3
  %s6 = scalar_select 0, %s5, %s3
  $region1: #{tpu_custom_call.1} parent=0
    #allocation2 [shape = 'u8[2048]{0}', space=vmem, size = 0x800, scoped, tag = 'input window, operand 0, single buffered']
    #allocation3 [shape = 's32[1]{0}', space=sflag, size = 0x4, scoped, tag = 'scoped memory for tpu_custom_call.1']
    #allocation4 [shape = 's32[1]{0}', space=sflag, size = 0x4, scoped, tag = 'scoped memory for tpu_custom_call.1']
    #allocation5 [shape = 'u8[2048]{0}', space=vmem, size = 0x800, scoped, tag = 'output window, operand 0, single buffered']
    %7 = vsyncpa [#allocation3], 0
    %8 = vsyncpa [#allocation4], 0
    // Predicated region
    $region2: #{tpu_custom_call.1} parent=1 // pred_check
      _
    $region3: #{tpu_custom_call.1} parent=1 // pred_check_branch
      %10 = sbr.rel (0) target = $region5
    $region4: #{tpu_custom_call.1} parent=1 // pred_region
      %s12 = ssub.s32 64, 64
      %13 = vsyncadd [#allocation3], %s12
      %s15 = sshll.u32 [#allocation2], 4
      %s16 = int_to_ptr.vmem [resolvable:$true] %s15
      %18 = dma.hbm_to_vmem [thread:$0]  %s0, 64, %s16, [#allocation3]
    $region5: #{tpu_custom_call.1} parent=1 // pred_fallthru
      _
    // Predicated region
    $region6: #{tpu_custom_call.1} parent=1 // pred_check
      _
    $region7: #{tpu_custom_call.1} parent=1 // pred_check_branch
      %20 = sbr.rel (0) target = $region9
    $region8: #{tpu_custom_call.1} parent=1 // pred_region
      _
    $region9: #{tpu_custom_call.1} parent=1 // pred_fallthru
      _
    // Predicated region
    $region10: #{tpu_custom_call.1} parent=1 // pred_check
      _
    $region11: #{tpu_custom_call.1} parent=1 // pred_check_branch
      %22 = sbr.rel (0) target = $region13
    $region12: #{tpu_custom_call.1} parent=1 // pred_region
      %23 = dma.done [#allocation3], 64
    $region13: #{tpu_custom_call.1} parent=1 // pred_fallthru
      _
    %v24 = vld [vmem:[#allocation2] sm:$0xf]
    %v25 = vld [vmem:[%s1] sm:$0x1]
    %v27 = vlaneseq
    %v28 = vshrl.u32 %v27, 7
    %v29 = vsub.s32 0, %v28
    %v30 = vrot.slane %v25, %v29
    %v32 = vadd.f32 %v24, %v30
    %33 = vst [vmem:[#allocation5] sm:$0xf] %v32
    // Predicated region
    $region14: #{tpu_custom_call.1} parent=1 // pred_check
      _
    $region15: #{tpu_custom_call.1} parent=1 // pred_check_branch
      %35 = sbr.rel (0) target = $region17
    $region16: #{tpu_custom_call.1} parent=1 // pred_region
      %s37 = ssub.s32 64, 64
      %38 = vsyncadd [#allocation4], %s37
      %s40 = sshll.u32 [#allocation5], 4
      %s41 = int_to_ptr.vmem [resolvable:$true] %s40
      %43 = dma.vmem_to_hbm [thread:$0]  %s41, 64, %s2, [#allocation4]
    $region17: #{tpu_custom_call.1} parent=1 // pred_fallthru
      _
    // Predicated region
    $region18: #{tpu_custom_call.1} parent=1 // pred_check
      _
    $region19: #{tpu_custom_call.1} parent=1 // pred_check_branch
      %45 = sbr.rel (0) target = $region21
    $region20: #{tpu_custom_call.1} parent=1 // pred_region
      %46 = dma.done [#allocation4], 64
    $region21: #{tpu_custom_call.1} parent=1 // pred_fallthru
      _
    %47 = vsyncpa [#allocation3], 1
    %48 = vsyncpa [#allocation4], 1

</llo_original>
